<compile_context>
chip_gen: v6e
topology: v6e:2x2x1
jax: 0.10.0
libtpu: 0.0.40
codegen_flags: <defaults>
</compile_context>

<pallas_src>
import jax
import jax.numpy as jnp
from jax.experimental import pallas as pl
from jax.experimental.pallas import tpu as pltpu


def _round_up(x, m):
    return (x + m - 1) // m * m


def _head_kernel(x_ref, w1_ref, b1_ref, w2_ref, b2_ref, wz_ref, bz_ref,
                 o_ref, acc_ref):
    """One (batch-tile, K-tile) grid step of the fused FC head.

    Grid = (M tiles, K tiles over D_in).  fc1 is accumulated over the K axis
    into an f32 VMEM scratch; on the last K step bias/ReLU, fc2, and the
    lane-padded z projection run and the output tile is stored.
    """
    k = pl.program_id(1)

    @pl.when(k == 0)
    def _init():
        acc_ref[...] = jnp.zeros_like(acc_ref)

    # fc1 partial product: bf16 operands, f32 accumulation on the MXU.
    acc_ref[...] += jnp.dot(x_ref[...], w1_ref[...],
                            preferred_element_type=jnp.float32)

    @pl.when(k == pl.num_programs(1) - 1)
    def _finalize():
        h1 = jnp.maximum(acc_ref[...] + b1_ref[...], 0.0)           # ReLU(fc1), f32
        h2 = jnp.dot(h1.astype(jnp.bfloat16), w2_ref[...],
                     preferred_element_type=jnp.float32)
        h2 = jnp.maximum(h2 + b2_ref[...], 0.0)                     # ReLU(fc2), f32
        z = jnp.dot(h2.astype(jnp.bfloat16), wz_ref[...],
                    preferred_element_type=jnp.float32)
        o_ref[...] = (z + bz_ref[...]).astype(o_ref.dtype)          # z_pred (lane-padded)


def fastrcnn_fc_head_forward(x, params, *, block_m=None, block_k=512):
    """x: (N, C, H, W) float32. params: dict of weights/biases. Returns (N, num_z_reg)."""
    n = x.shape[0]
    x2d = x.reshape(n, -1)                                          # same as torch .view
    d_in = x2d.shape[1]

    w1, b1 = params["w1"], params["b1"]                             # (D_in, fc_dim), (1, fc_dim)
    w2, b2 = params["w2"], params["b2"]                             # (fc_dim, fc_dim), (1, fc_dim)
    wz, bz = params["wz"], params["bz"]                             # (fc_dim, n_out), (1, n_out)
    fc_dim = w1.shape[1]
    n_out = wz.shape[1]

    # ---- tile sizing -------------------------------------------------------
    if block_m is None:
        block_m = min(128, _round_up(n, 8))                         # fill MXU rows
    block_m = max(8, _round_up(block_m, 8))
    n_pad = _round_up(n, block_m)                                   # pad batch, no assert

    block_k = max(128, min(_round_up(block_k, 128), _round_up(d_in, 128)))
    d_in_pad = _round_up(d_in, block_k)                             # zero-pad reduction dim

    n_out_pad = _round_up(n_out, 128)                               # lane-dense output

    # ---- operand prep: zero-pad + cast matmul operands to bf16 -------------
    xb = jnp.zeros((n_pad, d_in_pad), jnp.bfloat16).at[:n, :d_in].set(
        x2d.astype(jnp.bfloat16))
    w1b = jnp.zeros((d_in_pad, fc_dim), jnp.bfloat16).at[:d_in, :].set(
        w1.astype(jnp.bfloat16))
    w2b = w2.astype(jnp.bfloat16)
    wzb = jnp.zeros((fc_dim, n_out_pad), jnp.bfloat16).at[:, :n_out].set(
        wz.astype(jnp.bfloat16))
    b1f = b1.astype(jnp.float32)
    b2f = b2.astype(jnp.float32)
    bzf = jnp.zeros((1, n_out_pad), jnp.float32).at[:, :n_out].set(
        bz.astype(jnp.float32))

    grid = (n_pad // block_m, d_in_pad // block_k)                  # K (reduction) last

    # ---- explicit VMEM budget (double-buffered tiles + f32 accumulator) ----
    footprint = (
        2 * block_m * block_k * 2        # x tiles (bf16)
        + 2 * block_k * fc_dim * 2       # W1 tiles (bf16)
        + 2 * fc_dim * fc_dim * 2        # W2 (bf16)
        + 2 * fc_dim * n_out_pad * 2     # Wz (bf16)
        + 2 * 8 * fc_dim * 4 * 2         # biases (f32, sublane-padded)
        + 2 * 8 * n_out_pad * 4
        + 2 * block_m * n_out_pad * 4    # out tiles (f32)
        + block_m * fc_dim * 4           # accumulator scratch (f32)
    )
    vmem_limit = int(min(64 * 2 ** 20, max(2 * footprint, 8 * 2 ** 20)))

    out = pl.pallas_call(
        _head_kernel,
        out_shape=jax.ShapeDtypeStruct((n_pad, n_out_pad), jnp.float32),
        grid_spec=pltpu.PrefetchScalarGridSpec(
            num_scalar_prefetch=0,
            grid=grid,
            in_specs=[
                pl.BlockSpec((block_m, block_k), lambda i, k: (i, k)),    # x tile
                pl.BlockSpec((block_k, fc_dim), lambda i, k: (k, 0)),     # W1 K-tile
                pl.BlockSpec((1, fc_dim), lambda i, k: (0, 0)),           # b1
                pl.BlockSpec((fc_dim, fc_dim), lambda i, k: (0, 0)),      # W2 (whole)
                pl.BlockSpec((1, fc_dim), lambda i, k: (0, 0)),           # b2
                pl.BlockSpec((fc_dim, n_out_pad), lambda i, k: (0, 0)),   # Wz (lane-padded)
                pl.BlockSpec((1, n_out_pad), lambda i, k: (0, 0)),        # bz
            ],
            out_specs=pl.BlockSpec((block_m, n_out_pad), lambda i, k: (i, 0)),
            scratch_shapes=[pltpu.VMEM((block_m, fc_dim), jnp.float32)],
        ),
        compiler_params=pltpu.CompilerParams(
            dimension_semantics=("parallel", "arbitrary"),
            vmem_limit_bytes=vmem_limit,
        ),
    )(xb, w1b, b1f, w2b, b2f, wzb, bzf)

    return out[:n, :n_out]


def init_params(key, d_in, fc_dim, n_out):
    """Deterministic synthetic parameter init (shapes match the nn.Module)."""
    ks = jax.random.split(key, 6)
    scale1 = 1.0 / jnp.sqrt(d_in)
    scale2 = 1.0 / jnp.sqrt(fc_dim)
    return {
        "w1": jax.random.uniform(ks[0], (d_in, fc_dim), jnp.float32, -scale1, scale1),
        "b1": jax.random.uniform(ks[1], (1, fc_dim), jnp.float32, -scale1, scale1),
        "w2": jax.random.uniform(ks[2], (fc_dim, fc_dim), jnp.float32, -scale2, scale2),
        "b2": jax.random.uniform(ks[3], (1, fc_dim), jnp.float32, -scale2, scale2),
        "wz": jax.random.uniform(ks[4], (fc_dim, n_out), jnp.float32, -scale2, scale2),
        "bz": jax.random.uniform(ks[5], (1, n_out), jnp.float32, -scale2, scale2),
    }


def reference_forward_f32(x, params):
    """Pure-JAX f32 reference mirroring the PyTorch forward."""
    h = x.reshape(x.shape[0], -1)
    h = jax.nn.relu(h @ params["w1"] + params["b1"])
    h = jax.nn.relu(h @ params["w2"] + params["b2"])
    return h @ params["wz"] + params["bz"]


def reference_forward_bf16(x, params):
    """Reference with the same bf16-operand / f32-accumulate matmuls as the kernel."""
    bf16, f32 = jnp.bfloat16, jnp.float32
    h = x.reshape(x.shape[0], -1).astype(bf16)
    h = jax.nn.relu(jnp.dot(h, params["w1"].astype(bf16),
                            preferred_element_type=f32) + params["b1"])
    h = jax.nn.relu(jnp.dot(h.astype(bf16), params["w2"].astype(bf16),
                            preferred_element_type=f32) + params["b2"])
    return jnp.dot(h.astype(bf16), params["wz"].astype(bf16),
                   preferred_element_type=f32) + params["bz"]


if __name__ == "__main__":
    # Small shapes consistent with the module: flattened RoI feature of 256
    # (= 4 channels * 8 * 8 spatial), hidden fc_dim=128 (scaled-down from 1024),
    # reg_class_agnostic=True -> 1 output.
    N, C, H, W = 16, 4, 8, 8
    FC_DIM = 128
    N_OUT = 1          # reg_class_agnostic=True

    key = jax.random.PRNGKey(0)
    kx, kp = jax.random.split(key)
    x = jax.random.normal(kx, (N, C, H, W), dtype=jnp.float32)
    params = init_params(kp, C * H * W, FC_DIM, N_OUT)

    out = fastrcnn_fc_head_forward(x, params)
    out = jax.block_until_ready(out)

    ref_bf16 = reference_forward_bf16(x, params)
    ref_f32 = reference_forward_f32(x, params)
    assert out.shape == (N, N_OUT), out.shape
    assert jnp.allclose(out, ref_bf16, atol=1e-2, rtol=1e-2), \
        float(jnp.max(jnp.abs(out - ref_bf16)))
    assert jnp.allclose(out, ref_f32, atol=1e-1, rtol=1e-1), \
        float(jnp.max(jnp.abs(out - ref_f32)))

    # TODO(synk): the module's loss() (sampling-result gather + smooth-L1) is
    # training-time host logic and is not part of the forward pass kernel.
    print("KERNEL_OK")
</pallas_src>

<mosaic_0001>
module attributes {stable_mosaic.version = 11 : i64} {
  func.func @_head_kernel(%arg0: i32, %arg1: i32, %arg2: memref<16x256xbf16, #tpu.memory_space<vmem>>, %arg3: memref<256x128xbf16, #tpu.memory_space<vmem>>, %arg4: memref<1x128xf32, #tpu.memory_space<vmem>>, %arg5: memref<128x128xbf16, #tpu.memory_space<vmem>>, %arg6: memref<1x128xf32, #tpu.memory_space<vmem>>, %arg7: memref<128x128xbf16, #tpu.memory_space<vmem>>, %arg8: memref<1x128xf32, #tpu.memory_space<vmem>>, %arg9: memref<16x128xf32, #tpu.memory_space<vmem>>, %arg10: memref<16x128xf32, #tpu.memory_space<vmem>>) attributes {dimension_semantics = [#tpu.dimension_semantics<parallel>, #tpu.dimension_semantics<arbitrary>], iteration_bounds = array<i64: 1, 1>, scalar_prefetch = 0 : i64, scratch_operands = 1 : i64, tpu.core_type = #tpu.core_type<tc>, window_params = [{transform_indices = @transform_0, window_bounds = array<i64: 16, 256>}, {transform_indices = @transform_1, window_bounds = array<i64: 256, 128>}, {pipeline_mode = #tpu.pipeline_mode<synchronous>, transform_indices = @transform_2, window_bounds = array<i64: 1, 128>}, {pipeline_mode = #tpu.pipeline_mode<synchronous>, transform_indices = @transform_3, window_bounds = array<i64: 128, 128>}, {pipeline_mode = #tpu.pipeline_mode<synchronous>, transform_indices = @transform_4, window_bounds = array<i64: 1, 128>}, {pipeline_mode = #tpu.pipeline_mode<synchronous>, transform_indices = @transform_5, window_bounds = array<i64: 128, 128>}, {pipeline_mode = #tpu.pipeline_mode<synchronous>, transform_indices = @transform_6, window_bounds = array<i64: 1, 128>}, {transform_indices = @transform_7, window_bounds = array<i64: 16, 128>}]} {
    %c0_i32 = arith.constant 0 : i32
    %0 = arith.cmpi eq, %arg1, %c0_i32 : i32
    %1 = arith.extui %0 : i1 to i32
    %c0_i32_0 = arith.constant 0 : i32
    %2 = arith.cmpi ne, %1, %c0_i32_0 : i32
    scf.if %2 {
      %cst_10 = arith.constant 0.000000e+00 : f32
      %12 = vector.broadcast %cst_10 : f32 to vector<16x128xf32>
      %c0_11 = arith.constant 0 : index
      %c0_12 = arith.constant 0 : index
      %13 = vector.load %arg10[%c0_11, %c0_12] : memref<16x128xf32, #tpu.memory_space<vmem>>, vector<16x128xf32>
      tpu.vector_store %arg10[%c0_11, %c0_12], %12 {strides = array<i32>} : memref<16x128xf32, #tpu.memory_space<vmem>>, vector<16x128xf32>,
    } else {
    }
    %c0 = arith.constant 0 : index
    %c0_1 = arith.constant 0 : index
    %3 = vector.load %arg10[%c0, %c0_1] : memref<16x128xf32, #tpu.memory_space<vmem>>, vector<16x128xf32>
    %c0_2 = arith.constant 0 : index
    %c0_3 = arith.constant 0 : index
    %4 = vector.load %arg2[%c0_2, %c0_3] : memref<16x256xbf16, #tpu.memory_space<vmem>>, vector<16x256xbf16>
    %c0_4 = arith.constant 0 : index
    %c0_5 = arith.constant 0 : index
    %5 = vector.load %arg3[%c0_4, %c0_5] : memref<256x128xbf16, #tpu.memory_space<vmem>>, vector<256x128xbf16>
    %cst = arith.constant dense<0.000000e+00> : vector<16x128xf32>
    %6 = tpu.matmul %4, %5, %cst {dimension_numbers = #tpu.dot_dimension_numbers<[1], [0], [0], [1], [0, 0, 1, 1], [], []>} : vector<16x256xbf16>, vector<256x128xbf16>, vector<16x128xf32> -> vector<16x128xf32>
    %7 = arith.addf %3, %6 : vector<16x128xf32>
    %c0_6 = arith.constant 0 : index
    %c0_7 = arith.constant 0 : index
    %8 = vector.load %arg10[%c0_6, %c0_7] : memref<16x128xf32, #tpu.memory_space<vmem>>, vector<16x128xf32>
    tpu.vector_store %arg10[%c0_6, %c0_7], %7 {strides = array<i32>} : memref<16x128xf32, #tpu.memory_space<vmem>>, vector<16x128xf32>,
    %c0_i32_8 = arith.constant 0 : i32
    %9 = arith.cmpi eq, %arg1, %c0_i32_8 : i32
    %10 = arith.extui %9 : i1 to i32
    %c0_i32_9 = arith.constant 0 : i32
    %11 = arith.cmpi ne, %10, %c0_i32_9 : i32
    scf.if %11 {
      %c0_10 = arith.constant 0 : index
      %c0_11 = arith.constant 0 : index
      %12 = vector.load %arg10[%c0_10, %c0_11] : memref<16x128xf32, #tpu.memory_space<vmem>>, vector<16x128xf32>
      %c0_12 = arith.constant 0 : index
      %c0_13 = arith.constant 0 : index
      %13 = vector.load %arg4[%c0_12, %c0_13] : memref<1x128xf32, #tpu.memory_space<vmem>>, vector<1x128xf32>
      %14 = vector.broadcast %13 : vector<1x128xf32> to vector<16x128xf32>
      %15 = arith.addf %12, %14 : vector<16x128xf32>
      %cst_14 = arith.constant 0.000000e+00 : f32
      %16 = vector.broadcast %cst_14 : f32 to vector<16x128xf32>
      %17 = arith.maximumf %15, %16 : vector<16x128xf32>
      %18 = arith.truncf %17 : vector<16x128xf32> to vector<16x128xbf16>
      %c0_15 = arith.constant 0 : index
      %c0_16 = arith.constant 0 : index
      %19 = vector.load %arg5[%c0_15, %c0_16] : memref<128x128xbf16, #tpu.memory_space<vmem>>, vector<128x128xbf16>
      %cst_17 = arith.constant dense<0.000000e+00> : vector<16x128xf32>
      %20 = tpu.matmul %18, %19, %cst_17 {dimension_numbers = #tpu.dot_dimension_numbers<[1], [0], [0], [1], [0, 0, 1, 1], [], []>} : vector<16x128xbf16>, vector<128x128xbf16>, vector<16x128xf32> -> vector<16x128xf32>
      %c0_18 = arith.constant 0 : index
      %c0_19 = arith.constant 0 : index
      %21 = vector.load %arg6[%c0_18, %c0_19] : memref<1x128xf32, #tpu.memory_space<vmem>>, vector<1x128xf32>
      %22 = vector.broadcast %21 : vector<1x128xf32> to vector<16x128xf32>
      %23 = arith.addf %20, %22 : vector<16x128xf32>
      %cst_20 = arith.constant 0.000000e+00 : f32
      %24 = vector.broadcast %cst_20 : f32 to vector<16x128xf32>
      %25 = arith.maximumf %23, %24 : vector<16x128xf32>
      %26 = arith.truncf %25 : vector<16x128xf32> to vector<16x128xbf16>
      %c0_21 = arith.constant 0 : index
      %c0_22 = arith.constant 0 : index
      %27 = vector.load %arg7[%c0_21, %c0_22] : memref<128x128xbf16, #tpu.memory_space<vmem>>, vector<128x128xbf16>
      %cst_23 = arith.constant dense<0.000000e+00> : vector<16x128xf32>
      %28 = tpu.matmul %26, %27, %cst_23 {dimension_numbers = #tpu.dot_dimension_numbers<[1], [0], [0], [1], [0, 0, 1, 1], [], []>} : vector<16x128xbf16>, vector<128x128xbf16>, vector<16x128xf32> -> vector<16x128xf32>
      %c0_24 = arith.constant 0 : index
      %c0_25 = arith.constant 0 : index
      %29 = vector.load %arg8[%c0_24, %c0_25] : memref<1x128xf32, #tpu.memory_space<vmem>>, vector<1x128xf32>
      %30 = vector.broadcast %29 : vector<1x128xf32> to vector<16x128xf32>
      %31 = arith.addf %28, %30 : vector<16x128xf32>
      %c0_26 = arith.constant 0 : index
      %c0_27 = arith.constant 0 : index
      %32 = vector.load %arg9[%c0_26, %c0_27] : memref<16x128xf32, #tpu.memory_space<vmem>>, vector<16x128xf32>
      tpu.vector_store %arg9[%c0_26, %c0_27], %31 {strides = array<i32>} : memref<16x128xf32, #tpu.memory_space<vmem>>, vector<16x128xf32>,
    } else {
    }
    return
  }
  func.func @transform_0(%arg0: i32, %arg1: i32) -> (i32, i32) {
    %c0_i32 = arith.constant 0 : i32
    return %arg0, %arg1 : i32, i32
  }
  func.func @transform_1(%arg0: i32, %arg1: i32) -> (i32, i32) {
    %c0_i32 = arith.constant 0 : i32
    %c0_i32_0 = arith.constant 0 : i32
    return %arg1, %c0_i32 : i32, i32
  }
  func.func @transform_2(%arg0: i32, %arg1: i32) -> (i32, i32) {
    %c0_i32 = arith.constant 0 : i32
    %c0_i32_0 = arith.constant 0 : i32
    %c0_i32_1 = arith.constant 0 : i32
    return %c0_i32, %c0_i32_0 : i32, i32
  }
  func.func @transform_3(%arg0: i32, %arg1: i32) -> (i32, i32) {
    %c0_i32 = arith.constant 0 : i32
    %c0_i32_0 = arith.constant 0 : i32
    %c0_i32_1 = arith.constant 0 : i32
    return %c0_i32, %c0_i32_0 : i32, i32
  }
  func.func @transform_4(%arg0: i32, %arg1: i32) -> (i32, i32) {
    %c0_i32 = arith.constant 0 : i32
    %c0_i32_0 = arith.constant 0 : i32
    %c0_i32_1 = arith.constant 0 : i32
    return %c0_i32, %c0_i32_0 : i32, i32
  }
  func.func @transform_5(%arg0: i32, %arg1: i32) -> (i32, i32) {
    %c0_i32 = arith.constant 0 : i32
    %c0_i32_0 = arith.constant 0 : i32
    %c0_i32_1 = arith.constant 0 : i32
    return %c0_i32, %c0_i32_0 : i32, i32
  }
  func.func @transform_6(%arg0: i32, %arg1: i32) -> (i32, i32) {
    %c0_i32 = arith.constant 0 : i32
    %c0_i32_0 = arith.constant 0 : i32
    %c0_i32_1 = arith.constant 0 : i32
    return %c0_i32, %c0_i32_0 : i32, i32
  }
  func.func @transform_7(%arg0: i32, %arg1: i32) -> (i32, i32) {
    %c0_i32 = arith.constant 0 : i32
    %c0_i32_0 = arith.constant 0 : i32
    return %arg0, %c0_i32 : i32, i32
  }
}

</mosaic_0001>

<llo_original>
// kernel: tpu_custom_call.1
$region0: #{tpu_custom_call.1}
  #allocation0 [shape = 'u32[]', space=smem, size = 0x4, offset = 0x4, fixed_abs, tag = 'smem constant byte address 0x4 - core index']
  #allocation1 [shape = 'u32[144,128]{1,0:T(1,128)}', space=vmem, size = 0x12000, scoped, tag = 'internal scratch']
  #allocation2 [shape = 'f32[16,128]{1,0:T(8,128)}', space=vmem, size = 0x2000, scoped, tag = 'scratch operand']
  %s0 = inlined_call_operand.hbm [shape: bf16[16,256], index: 0, kind: input, shape index: {}]
  %s1 = inlined_call_operand.hbm [shape: bf16[256,128], index: 1, kind: input, shape index: {}]
  %s2 = inlined_call_operand.vmem [shape: f32[1,128], index: 2, kind: input, shape index: {}]
  %s3 = inlined_call_operand.hbm [shape: bf16[128,128], index: 3, kind: input, shape index: {}]
  %s4 = inlined_call_operand.vmem [shape: f32[1,128], index: 4, kind: input, shape index: {}]
  %s5 = inlined_call_operand.hbm [shape: bf16[128,128], index: 5, kind: input, shape index: {}]
  %s6 = inlined_call_operand.vmem [shape: f32[1,128], index: 6, kind: input, shape index: {}]
  %s7 = inlined_call_operand.hbm [shape: f32[16,128], index: 7, kind: output, shape index: {}]
  %s8 = sld [smem:[#allocation0]]
  $region62: #{tpu_custom_call.1} parent=0
    _
  %s10 = ssub.s32 1, %s8
  %s11 = scalar_select 0, %s10, %s8
  $region1: #{tpu_custom_call.1} parent=0
    #allocation3 [shape = 'u8[8192]{0}', space=vmem, size = 0x2000, scoped, tag = 'input window, operand 0, single buffered']
    #allocation4 [shape = 's32[1]{0}', space=sflag, size = 0x4, scoped, tag = 'scoped memory for tpu_custom_call.1']
    #allocation5 [shape = 's32[1]{0}', space=sflag, size = 0x4, scoped, tag = 'scoped memory for tpu_custom_call.1']
    #allocation6 [shape = 'u8[65536]{0}', space=vmem, size = 0x10000, scoped, tag = 'input window, operand 1, single buffered']
    #allocation7 [shape = 's32[1]{0}', space=sflag, size = 0x4, scoped, tag = 'scoped memory for tpu_custom_call.1']
    #allocation8 [shape = 'u8[32768]{0}', space=vmem, size = 0x8000, scoped, tag = 'input window, operand 3, single buffered']
    #allocation9 [shape = 'u8[32768]{0}', space=vmem, size = 0x8000, scoped, tag = 'input window, operand 5, single buffered']
    #allocation10 [shape = 's32[1]{0}', space=sflag, size = 0x4, scoped, tag = 'scoped memory for tpu_custom_call.1']
    #allocation11 [shape = 'u8[8192]{0}', space=vmem, size = 0x2000, scoped, tag = 'output window, operand 0, single buffered']
    %12 = vsyncpa [#allocation4], 0
    %13 = vsyncpa [#allocation7], 0
    %14 = vsyncpa [#allocation10], 0
    %15 = vsyncpa [#allocation5], 0
    // Predicated region
    $region2: #{tpu_custom_call.1} parent=1 // pred_check
      _
    $region3: #{tpu_custom_call.1} parent=1 // pred_check_branch
      %17 = sbr.rel (0) target = $region5
    $region4: #{tpu_custom_call.1} parent=1 // pred_region
      %s19 = ssub.s32 256, 256
      %20 = vsyncadd [#allocation4], %s19
      %s21 = sshll.u32 [#allocation3], 4
      %s22 = int_to_ptr.vmem [resolvable:$true] %s21
      %27 = dma.hbm_to_vmem [thread:$0]  %s0, 256, %s22, [#allocation4], 128, 128, 8
    $region5: #{tpu_custom_call.1} parent=1 // pred_fallthru
      _
    // Predicated region
    $region6: #{tpu_custom_call.1} parent=1 // pred_check
      _
    $region7: #{tpu_custom_call.1} parent=1 // pred_check_branch
      %29 = sbr.rel (0) target = $region9
    $region8: #{tpu_custom_call.1} parent=1 // pred_region
      %s31 = ssub.s32 2048, 2048
      %32 = vsyncadd [#allocation7], %s31
      %s33 = sshll.u32 [#allocation6], 4
      %s34 = int_to_ptr.vmem [resolvable:$true] %s33
      %39 = dma.hbm_to_vmem [thread:$0]  %s1, 2048, %s34, [#allocation7], 64, 64, 4
    $region9: #{tpu_custom_call.1} parent=1 // pred_fallthru
      _
    // Predicated region
    $region10: #{tpu_custom_call.1} parent=1 // pred_check
      _
    $region11: #{tpu_custom_call.1} parent=1 // pred_check_branch
      %41 = sbr.rel (0) target = $region13
    $region12: #{tpu_custom_call.1} parent=1 // pred_region
      _
    $region13: #{tpu_custom_call.1} parent=1 // pred_fallthru
      _
    // Predicated region
    $region14: #{tpu_custom_call.1} parent=1 // pred_check
      _
    $region15: #{tpu_custom_call.1} parent=1 // pred_check_branch
      %43 = sbr.rel (0) target = $region17
    $region16: #{tpu_custom_call.1} parent=1 // pred_region
      %s45 = ssub.s32 1024, 1024
      %46 = vsyncadd [#allocation7], %s45
      %s47 = sshll.u32 [#allocation8], 4
      %s48 = int_to_ptr.vmem [resolvable:$true] %s47
      %53 = dma.hbm_to_vmem [thread:$0]  %s3, 1024, %s48, [#allocation7], 64, 64, 4
    $region17: #{tpu_custom_call.1} parent=1 // pred_fallthru
      _
    // Predicated region
    $region18: #{tpu_custom_call.1} parent=1 // pred_check
      _
    $region19: #{tpu_custom_call.1} parent=1 // pred_check_branch
      %55 = sbr.rel (0) target = $region21
    $region20: #{tpu_custom_call.1} parent=1 // pred_region
      _
    $region21: #{tpu_custom_call.1} parent=1 // pred_fallthru
      _
    // Predicated region
    $region22: #{tpu_custom_call.1} parent=1 // pred_check
      _
    $region23: #{tpu_custom_call.1} parent=1 // pred_check_branch
      %57 = sbr.rel (0) target = $region25
    $region24: #{tpu_custom_call.1} parent=1 // pred_region
      %s59 = ssub.s32 1024, 1024
      %60 = vsyncadd [#allocation10], %s59
      %s61 = sshll.u32 [#allocation9], 4
      %s62 = int_to_ptr.vmem [resolvable:$true] %s61
      %67 = dma.hbm_to_vmem [thread:$0]  %s5, 1024, %s62, [#allocation10], 64, 64, 4
    $region25: #{tpu_custom_call.1} parent=1 // pred_fallthru
      _
    // Predicated region
    $region26: #{tpu_custom_call.1} parent=1 // pred_check
      _
    $region27: #{tpu_custom_call.1} parent=1 // pred_check_branch
      %69 = sbr.rel (0) target = $region29
    $region28: #{tpu_custom_call.1} parent=1 // pred_region
      _
    $region29: #{tpu_custom_call.1} parent=1 // pred_fallthru
      _
    // Predicated region
    $region30: #{tpu_custom_call.1} parent=1 // pred_check
      _
    $region31: #{tpu_custom_call.1} parent=1 // pred_check_branch
      %71 = sbr.rel (0) target = $region33
    $region32: #{tpu_custom_call.1} parent=1 // pred_region
      %72 = dma.done [#allocation4], 256
    $region33: #{tpu_custom_call.1} parent=1 // pred_fallthru
      _
    // Predicated region
    $region34: #{tpu_custom_call.1} parent=1 // pred_check
      _
    $region35: #{tpu_custom_call.1} parent=1 // pred_check_branch
      %74 = sbr.rel (0) target = $region37
    $region36: #{tpu_custom_call.1} parent=1 // pred_region
      %75 = dma.done [#allocation7], 2048
    $region37: #{tpu_custom_call.1} parent=1 // pred_fallthru
      _
    // Predicated region
    $region38: #{tpu_custom_call.1} parent=1 // pred_check
      _
    $region39: #{tpu_custom_call.1} parent=1 // pred_check_branch
      %77 = sbr.rel (0) target = $region41
    $region40: #{tpu_custom_call.1} parent=1 // pred_region
      %78 = dma.done [#allocation7], 1024
    $region41: #{tpu_custom_call.1} parent=1 // pred_fallthru
      _
    // Predicated region
    $region42: #{tpu_custom_call.1} parent=1 // pred_check
      _
    $region43: #{tpu_custom_call.1} parent=1 // pred_check_branch
      %80 = sbr.rel (0) target = $region45
    $region44: #{tpu_custom_call.1} parent=1 // pred_region
      %81 = dma.done [#allocation10], 1024
    $region45: #{tpu_custom_call.1} parent=1 // pred_fallthru
      _
    %p83 = scmp.eq.s32.totalorder 0, 0
    // Predicated region
    $region46: #{tpu_custom_call.1} parent=1 // pred_check
      %p84 = pneg %p83
    $region47: #{tpu_custom_call.1} parent=1 // pred_check_branch
      %86 = sbr.rel (%p84) target = $region49
    $region48: #{tpu_custom_call.1} parent=1 // pred_region
      %87 = vst [vmem:[#allocation2] sm:$0xff] 0.0
      %88 = vst [vmem:[#allocation2 + $0x8] sm:$0xff] 0.0
    $region49: #{tpu_custom_call.1} parent=1 // pred_fallthru
      _
    %v89 = vld [vmem:[#allocation2] sm:$0xff]
    %v90 = vld [vmem:[#allocation2 + $0x8] sm:$0xff]
    %v91 = vld [vmem:[#allocation3] sm:$0xff]
    %v92 = vld [vmem:[#allocation3 + $0x8] sm:$0xff]
    %v93 = vld [vmem:[#allocation6] sm:$0xf]
    %v94 = vld [vmem:[#allocation6 + $0x4] sm:$0xf]
    %v95 = vld [vmem:[#allocation6 + $0x8] sm:$0xf]
    %v96 = vld [vmem:[#allocation6 + $0xc] sm:$0xf]
    %v97 = vld [vmem:[#allocation6 + $0x10] sm:$0xf]
    %v98 = vld [vmem:[#allocation6 + $0x14] sm:$0xf]
    %v99 = vld [vmem:[#allocation6 + $0x18] sm:$0xf]
    %v100 = vld [vmem:[#allocation6 + $0x1c] sm:$0xf]
    %v101 = vld [vmem:[#allocation6 + $0x20] sm:$0xf]
    %v102 = vld [vmem:[#allocation6 + $0x24] sm:$0xf]
    %v103 = vld [vmem:[#allocation6 + $0x28] sm:$0xf]
    %v104 = vld [vmem:[#allocation6 + $0x2c] sm:$0xf]
    %v105 = vld [vmem:[#allocation6 + $0x30] sm:$0xf]
    %v106 = vld [vmem:[#allocation6 + $0x34] sm:$0xf]
    %v107 = vld [vmem:[#allocation6 + $0x38] sm:$0xf]
    %v108 = vld [vmem:[#allocation6 + $0x3c] sm:$0xf]
    %v109 = vld [vmem:[#allocation6 + $0x40] sm:$0xf]
    %v110 = vld [vmem:[#allocation6 + $0x44] sm:$0xf]
    %v111 = vld [vmem:[#allocation6 + $0x48] sm:$0xf]
    %v112 = vld [vmem:[#allocation6 + $0x4c] sm:$0xf]
    %v113 = vld [vmem:[#allocation6 + $0x50] sm:$0xf]
    %v114 = vld [vmem:[#allocation6 + $0x54] sm:$0xf]
    %v115 = vld [vmem:[#allocation6 + $0x58] sm:$0xf]
    %v116 = vld [vmem:[#allocation6 + $0x5c] sm:$0xf]
    %v117 = vld [vmem:[#allocation6 + $0x60] sm:$0xf]
    %v118 = vld [vmem:[#allocation6 + $0x64] sm:$0xf]
    %v119 = vld [vmem:[#allocation6 + $0x68] sm:$0xf]
    %v120 = vld [vmem:[#allocation6 + $0x6c] sm:$0xf]
    %v121 = vld [vmem:[#allocation6 + $0x70] sm:$0xf]
    %v122 = vld [vmem:[#allocation6 + $0x74] sm:$0xf]
    %v123 = vld [vmem:[#allocation6 + $0x78] sm:$0xf]
    %v124 = vld [vmem:[#allocation6 + $0x7c] sm:$0xf]
    %v127 = vunpack.c.l.b16 %v91
    %v128 = vunpack.c.h.b16 %v91
    %v129 = vunpack.c.l.b16 %v92
    %v130 = vunpack.c.h.b16 %v92
    %v131 = vpack.c.b16 %v129, %v127
    %v132 = vpack.c.b16 %v130, %v128
    %v167 = vunpack.c.l.b16 %v93
    %v168 = vunpack.c.l.b16 %v94
    %v169 = vunpack.c.l.b16 %v95
    %v170 = vunpack.c.l.b16 %v96
    %v171 = vunpack.c.l.b16 %v97
    %v172 = vunpack.c.l.b16 %v98
    %v173 = vunpack.c.l.b16 %v99
    %v174 = vunpack.c.l.b16 %v100
    %v175 = vunpack.c.l.b16 %v101
    %v176 = vunpack.c.l.b16 %v102
    %v177 = vunpack.c.l.b16 %v103
    %v178 = vunpack.c.l.b16 %v104
    %v179 = vunpack.c.l.b16 %v105
    %v180 = vunpack.c.l.b16 %v106
    %v181 = vunpack.c.l.b16 %v107
    %v182 = vunpack.c.l.b16 %v108
    %v183 = vunpack.c.l.b16 %v109
    %v184 = vunpack.c.l.b16 %v110
    %v185 = vunpack.c.l.b16 %v111
    %v186 = vunpack.c.l.b16 %v112
    %v187 = vunpack.c.l.b16 %v113
    %v188 = vunpack.c.l.b16 %v114
    %v189 = vunpack.c.l.b16 %v115
    %v190 = vunpack.c.l.b16 %v116
    %v191 = vunpack.c.l.b16 %v117
    %v192 = vunpack.c.l.b16 %v118
    %v193 = vunpack.c.l.b16 %v119
    %v194 = vunpack.c.l.b16 %v120
    %v195 = vunpack.c.l.b16 %v121
    %v196 = vunpack.c.l.b16 %v122
    %v197 = vunpack.c.l.b16 %v123
    %v198 = vunpack.c.l.b16 %v124
    %v199 = vpack.c.b16 %v168, %v167
    %v200 = vpack.c.b16 %v170, %v169
    %v201 = vpack.c.b16 %v172, %v171
    %v202 = vpack.c.b16 %v174, %v173
    %v203 = vpack.c.b16 %v176, %v175
    %v204 = vpack.c.b16 %v178, %v177
    %v205 = vpack.c.b16 %v180, %v179
    %v206 = vpack.c.b16 %v182, %v181
    %v207 = vpack.c.b16 %v184, %v183
    %v208 = vpack.c.b16 %v186, %v185
    %v209 = vpack.c.b16 %v188, %v187
    %v210 = vpack.c.b16 %v190, %v189
    %v211 = vpack.c.b16 %v192, %v191
    %v212 = vpack.c.b16 %v194, %v193
    %v213 = vpack.c.b16 %v196, %v195
    %v214 = vpack.c.b16 %v198, %v197
    %231 = vmatprep.subr.bf16.mxu0 0
    %232 = vmatpush1.bf16.msra.mxu0 %v206
    %233 = vmatprep.subr.bf16.mxu0 0
    %234 = vmatpush1.bf16.msra.mxu0 %v205
    %235 = vmatprep.subr.bf16.mxu0 0
    %236 = vmatpush1.bf16.msra.mxu0 %v204
    %237 = vmatprep.subr.bf16.mxu0 0
    %238 = vmatpush1.bf16.msra.mxu0 %v203
    %239 = vmatprep.subr.bf16.mxu0 0
    %240 = vmatpush1.bf16.msra.mxu0 %v202
    %241 = vmatprep.subr.bf16.mxu0 0
    %242 = vmatpush1.bf16.msra.mxu0 %v201
    %243 = vmatprep.subr.bf16.mxu0 0
    %244 = vmatpush1.bf16.msra.mxu0 %v200
    %245 = vmatprep.subr.bf16.mxu0 0
    %246 = vmatpush1.bf16.msra.mxu0 %v199
    %247 = vmatprep.subr.bf16.mxu0 0
    %248 = vmatpush2.bf16.msra.mxu0 %v214
    %249 = vmatprep.subr.bf16.mxu0 0
    %250 = vmatpush2.bf16.msra.mxu0 %v213
    %251 = vmatprep.subr.bf16.mxu0 0
    %252 = vmatpush2.bf16.msra.mxu0 %v212
    %253 = vmatprep.subr.bf16.mxu0 0
    %254 = vmatpush2.bf16.msra.mxu0 %v211
    %255 = vmatprep.subr.bf16.mxu0 0
    %256 = vmatpush2.bf16.msra.mxu0 %v210
    %257 = vmatprep.subr.bf16.mxu0 0
    %258 = vmatpush2.bf16.msra.mxu0 %v209
    %259 = vmatprep.subr.bf16.mxu0 0
    %260 = vmatpush2.bf16.msra.mxu0 %v208
    %261 = vmatprep.subr.bf16.mxu0 0
    %262 = vmatpush2.bf16.msra.mxu0 %v207
    %263 = vmatprep.mubr.bf16.mxu0 %v132
    %264 = vmatmul.mubr.bf16.gmra.mxu0 %v131
    %v265 = vpop.f32.mrf.mxu0
    %v266 = vadd.f32 0.0, %v265
    %v267 = vpop.f32.mrf.mxu0
    %v268 = vpop.f32.mrf.mxu0
    %v269 = vadd.f32 0.0, %v268
    %v270 = vpop.f32.mrf.mxu0
    %271 = vdwg.mxu0
    %v272 = vadd.f32 %v89, %v266
    %v273 = vadd.f32 %v90, %v269
    %274 = vst [vmem:[#allocation2] sm:$0xff] %v272
    %275 = vst [vmem:[#allocation2 + $0x8] sm:$0xff] %v273
    // Predicated region
    $region50: #{tpu_custom_call.1} parent=1 // pred_check
      %p276 = pneg %p83
    $region51: #{tpu_custom_call.1} parent=1 // pred_check_branch
      %278 = sbr.rel (%p276) target = $region53
    $region52: #{tpu_custom_call.1} parent=1 // pred_region
      %v279 = vld [vmem:[#allocation2] sm:$0xff]
      %v280 = vld [vmem:[#allocation2 + $0x8] sm:$0xff]
      %v281 = vld [vmem:[%s2] sm:$0x1]
      %v283 = vlaneseq
      %v284 = vshrl.u32 %v283, 7
      %v285 = vsub.s32 0, %v284
      %v286 = vrot.slane %v281, %v285
      %v288 = vadd.f32 %v279, %v286
      %v289 = vadd.f32 %v280, %v286
      %v290 = vmax.f32 %v288, 0.0
      %v291 = vmax.f32 %v289, 0.0
      %v292 = vpack.c.bf16 %v291, %v290
      %v293 = vld [vmem:[#allocation8] sm:$0xf]
      %v294 = vld [vmem:[#allocation8 + $0x4] sm:$0xf]
      %v295 = vld [vmem:[#allocation8 + $0x8] sm:$0xf]
      %v296 = vld [vmem:[#allocation8 + $0xc] sm:$0xf]
      %v297 = vld [vmem:[#allocation8 + $0x10] sm:$0xf]
      %v298 = vld [vmem:[#allocation8 + $0x14] sm:$0xf]
      %v299 = vld [vmem:[#allocation8 + $0x18] sm:$0xf]
      %v300 = vld [vmem:[#allocation8 + $0x1c] sm:$0xf]
      %v301 = vld [vmem:[#allocation8 + $0x20] sm:$0xf]
      %v302 = vld [vmem:[#allocation8 + $0x24] sm:$0xf]
      %v303 = vld [vmem:[#allocation8 + $0x28] sm:$0xf]
      %v304 = vld [vmem:[#allocation8 + $0x2c] sm:$0xf]
      %v305 = vld [vmem:[#allocation8 + $0x30] sm:$0xf]
      %v306 = vld [vmem:[#allocation8 + $0x34] sm:$0xf]
      %v307 = vld [vmem:[#allocation8 + $0x38] sm:$0xf]
      %v308 = vld [vmem:[#allocation8 + $0x3c] sm:$0xf]
      %v309 = vld [vmem:[%s4] sm:$0x1]
      %v311 = vlaneseq
      %v312 = vshrl.u32 %v311, 7
      %v313 = vsub.s32 0, %v312
      %v314 = vrot.slane %v309, %v313
      %v332 = vunpack.c.l.b16 %v293
      %v333 = vunpack.c.l.b16 %v294
      %v334 = vunpack.c.l.b16 %v295
      %v335 = vunpack.c.l.b16 %v296
      %v336 = vunpack.c.l.b16 %v297
      %v337 = vunpack.c.l.b16 %v298
      %v338 = vunpack.c.l.b16 %v299
      %v339 = vunpack.c.l.b16 %v300
      %v340 = vunpack.c.l.b16 %v301
      %v341 = vunpack.c.l.b16 %v302
      %v342 = vunpack.c.l.b16 %v303
      %v343 = vunpack.c.l.b16 %v304
      %v344 = vunpack.c.l.b16 %v305
      %v345 = vunpack.c.l.b16 %v306
      %v346 = vunpack.c.l.b16 %v307
      %v347 = vunpack.c.l.b16 %v308
      %v348 = vpack.c.b16 %v333, %v332
      %v349 = vpack.c.b16 %v335, %v334
      %v350 = vpack.c.b16 %v337, %v336
      %v351 = vpack.c.b16 %v339, %v338
      %v352 = vpack.c.b16 %v341, %v340
      %v353 = vpack.c.b16 %v343, %v342
      %v354 = vpack.c.b16 %v345, %v344
      %v355 = vpack.c.b16 %v347, %v346
      %364 = vmatprep.subr.bf16.mxu0 0
      %365 = vmatpush1.bf16.msra.mxu0 %v355
      %366 = vmatprep.subr.bf16.mxu0 0
      %367 = vmatpush1.bf16.msra.mxu0 %v354
      %368 = vmatprep.subr.bf16.mxu0 0
      %369 = vmatpush1.bf16.msra.mxu0 %v353
      %370 = vmatprep.subr.bf16.mxu0 0
      %371 = vmatpush1.bf16.msra.mxu0 %v352
      %372 = vmatprep.subr.bf16.mxu0 0
      %373 = vmatpush1.bf16.msra.mxu0 %v351
      %374 = vmatprep.subr.bf16.mxu0 0
      %375 = vmatpush1.bf16.msra.mxu0 %v350
      %376 = vmatprep.subr.bf16.mxu0 0
      %377 = vmatpush1.bf16.msra.mxu0 %v349
      %378 = vmatprep.subr.bf16.mxu0 0
      %379 = vmatpush1.bf16.msra.mxu0 %v348
      %380 = vmatprep.subr.bf16.mxu0 0
      %381 = vmatpush2.bf16.msra.mxu0 0
      %382 = vmatprep.subr.bf16.mxu0 0
      %383 = vmatpush2.bf16.msra.mxu0 0
      %384 = vmatprep.subr.bf16.mxu0 0
      %385 = vmatpush2.bf16.msra.mxu0 0
      %386 = vmatprep.subr.bf16.mxu0 0
      %387 = vmatpush2.bf16.msra.mxu0 0
      %388 = vmatprep.subr.bf16.mxu0 0
      %389 = vmatpush2.bf16.msra.mxu0 0
      %390 = vmatprep.subr.bf16.mxu0 0
      %391 = vmatpush2.bf16.msra.mxu0 0
      %392 = vmatprep.subr.bf16.mxu0 0
      %393 = vmatpush2.bf16.msra.mxu0 0
      %394 = vmatprep.subr.bf16.mxu0 0
      %395 = vmatpush2.bf16.msra.mxu0 0
      %396 = vmatprep.mubr.bf16.mxu0 0
      %397 = vmatmul.mubr.bf16.gmra.mxu0 %v292
      %v398 = vpop.f32.mrf.mxu0
      %v399 = vadd.f32 %v314, %v398
      %v400 = vpop.f32.mrf.mxu0
      %v401 = vpop.f32.mrf.mxu0
      %v402 = vadd.f32 %v314, %v401
      %v403 = vpop.f32.mrf.mxu0
      %404 = vdwg.mxu0
      %v405 = vmax.f32 %v399, 0.0
      %v406 = vmax.f32 %v402, 0.0
      %v407 = vpack.c.bf16 %v406, %v405
      %v408 = vld [vmem:[#allocation9] sm:$0xf]
      %v409 = vld [vmem:[#allocation9 + $0x4] sm:$0xf]
      %v410 = vld [vmem:[#allocation9 + $0x8] sm:$0xf]
      %v411 = vld [vmem:[#allocation9 + $0xc] sm:$0xf]
      %v412 = vld [vmem:[#allocation9 + $0x10] sm:$0xf]
      %v413 = vld [vmem:[#allocation9 + $0x14] sm:$0xf]
      %v414 = vld [vmem:[#allocation9 + $0x18] sm:$0xf]
      %v415 = vld [vmem:[#allocation9 + $0x1c] sm:$0xf]
      %v416 = vld [vmem:[#allocation9 + $0x20] sm:$0xf]
      %v417 = vld [vmem:[#allocation9 + $0x24] sm:$0xf]
      %v418 = vld [vmem:[#allocation9 + $0x28] sm:$0xf]
      %v419 = vld [vmem:[#allocation9 + $0x2c] sm:$0xf]
      %v420 = vld [vmem:[#allocation9 + $0x30] sm:$0xf]
      %v421 = vld [vmem:[#allocation9 + $0x34] sm:$0xf]
      %v422 = vld [vmem:[#allocation9 + $0x38] sm:$0xf]
      %v423 = vld [vmem:[#allocation9 + $0x3c] sm:$0xf]
      %v424 = vld [vmem:[%s6] sm:$0x1]
      %v426 = vlaneseq
      %v427 = vshrl.u32 %v426, 7
      %v428 = vsub.s32 0, %v427
      %v429 = vrot.slane %v424, %v428
      %v447 = vunpack.c.l.b16 %v408
      %v448 = vunpack.c.l.b16 %v409
      %v449 = vunpack.c.l.b16 %v410
      %v450 = vunpack.c.l.b16 %v411
      %v451 = vunpack.c.l.b16 %v412
      %v452 = vunpack.c.l.b16 %v413
      %v453 = vunpack.c.l.b16 %v414
      %v454 = vunpack.c.l.b16 %v415
      %v455 = vunpack.c.l.b16 %v416
      %v456 = vunpack.c.l.b16 %v417
      %v457 = vunpack.c.l.b16 %v418
      %v458 = vunpack.c.l.b16 %v419
      %v459 = vunpack.c.l.b16 %v420
      %v460 = vunpack.c.l.b16 %v421
      %v461 = vunpack.c.l.b16 %v422
      %v462 = vunpack.c.l.b16 %v423
      %v463 = vpack.c.b16 %v448, %v447
      %v464 = vpack.c.b16 %v450, %v449
      %v465 = vpack.c.b16 %v452, %v451
      %v466 = vpack.c.b16 %v454, %v453
      %v467 = vpack.c.b16 %v456, %v455
      %v468 = vpack.c.b16 %v458, %v457
      %v469 = vpack.c.b16 %v460, %v459
      %v470 = vpack.c.b16 %v462, %v461
      %479 = vmatprep.subr.bf16.mxu0 0
      %480 = vmatpush1.bf16.msra.mxu0 %v470
      %481 = vmatprep.subr.bf16.mxu0 0
      %482 = vmatpush1.bf16.msra.mxu0 %v469
      %483 = vmatprep.subr.bf16.mxu0 0
      %484 = vmatpush1.bf16.msra.mxu0 %v468
      %485 = vmatprep.subr.bf16.mxu0 0
      %486 = vmatpush1.bf16.msra.mxu0 %v467
      %487 = vmatprep.subr.bf16.mxu0 0
      %488 = vmatpush1.bf16.msra.mxu0 %v466
      %489 = vmatprep.subr.bf16.mxu0 0
      %490 = vmatpush1.bf16.msra.mxu0 %v465
      %491 = vmatprep.subr.bf16.mxu0 0
      %492 = vmatpush1.bf16.msra.mxu0 %v464
      %493 = vmatprep.subr.bf16.mxu0 0
      %494 = vmatpush1.bf16.msra.mxu0 %v463
      %495 = vmatprep.subr.bf16.mxu0 0
      %496 = vmatpush2.bf16.msra.mxu0 0
      %497 = vmatprep.subr.bf16.mxu0 0
      %498 = vmatpush2.bf16.msra.mxu0 0
      %499 = vmatprep.subr.bf16.mxu0 0
      %500 = vmatpush2.bf16.msra.mxu0 0
      %501 = vmatprep.subr.bf16.mxu0 0
      %502 = vmatpush2.bf16.msra.mxu0 0
      %503 = vmatprep.subr.bf16.mxu0 0
      %504 = vmatpush2.bf16.msra.mxu0 0
      %505 = vmatprep.subr.bf16.mxu0 0
      %506 = vmatpush2.bf16.msra.mxu0 0
      %507 = vmatprep.subr.bf16.mxu0 0
      %508 = vmatpush2.bf16.msra.mxu0 0
      %509 = vmatprep.subr.bf16.mxu0 0
      %510 = vmatpush2.bf16.msra.mxu0 0
      %511 = vmatprep.mubr.bf16.mxu0 0
      %512 = vmatmul.mubr.bf16.gmra.mxu0 %v407
      %v513 = vpop.f32.mrf.mxu0
      %v514 = vadd.f32 %v429, %v513
      %v515 = vpop.f32.mrf.mxu0
      %v516 = vpop.f32.mrf.mxu0
      %v517 = vadd.f32 %v429, %v516
      %v518 = vpop.f32.mrf.mxu0
      %519 = vdwg.mxu0
      %520 = vst [vmem:[#allocation11] sm:$0xff] %v514
      %521 = vst [vmem:[#allocation11 + $0x8] sm:$0xff] %v517
    $region53: #{tpu_custom_call.1} parent=1 // pred_fallthru
      _
    // Predicated region
    $region54: #{tpu_custom_call.1} parent=1 // pred_check
      _
    $region55: #{tpu_custom_call.1} parent=1 // pred_check_branch
      %523 = sbr.rel (0) target = $region57
    $region56: #{tpu_custom_call.1} parent=1 // pred_region
      %s525 = ssub.s32 256, 256
      %526 = vsyncadd [#allocation5], %s525
      %s527 = sshll.u32 [#allocation11], 4
      %s528 = int_to_ptr.vmem [resolvable:$true] %s527
      %533 = dma.vmem_to_hbm [thread:$0]  %s528, 256, %s7, [#allocation5], 128, 128, 8
    $region57: #{tpu_custom_call.1} parent=1 // pred_fallthru
      _
    // Predicated region
    $region58: #{tpu_custom_call.1} parent=1 // pred_check
      _
    $region59: #{tpu_custom_call.1} parent=1 // pred_check_branch
      %535 = sbr.rel (0) target = $region61
    $region60: #{tpu_custom_call.1} parent=1 // pred_region
      %536 = dma.done [#allocation5], 256
    $region61: #{tpu_custom_call.1} parent=1 // pred_fallthru
      _
    %537 = vsyncpa [#allocation4], 1
    %538 = vsyncpa [#allocation7], 1
    %539 = vsyncpa [#allocation10], 1
    %540 = vsyncpa [#allocation5], 1

</llo_original>
